<compile_context>
chip_gen: v6e
topology: v6e:2x2x1
jax: 0.10.0
libtpu: 0.0.40
codegen_flags: <defaults>
</compile_context>

<pallas_src>
import math
import jax
import jax.numpy as jnp
from jax.experimental import pallas as pl
from jax.experimental.pallas import tpu as pltpu


def _round_up(x: int, m: int) -> int:
    return ((x + m - 1) // m) * m


# ---------------------------------------------------------------------------
# Pallas kernel: classifier linear head  logits = x @ W^T + b
# ---------------------------------------------------------------------------
def _classifier_kernel(x_ref, w_ref, b_ref, o_ref):
    # x_ref: (TM, D)     bf16 tile of flattened features
    # w_ref: (D, N_pad)  bf16 transposed classifier weight (resident)
    # b_ref: (1, N_pad)  f32 classifier bias (resident)
    # o_ref: (TM, N_pad) f32 output logits tile (lane-dense, N_pad % 128 == 0)
    acc = jnp.dot(x_ref[...], w_ref[...], preferred_element_type=jnp.float32)
    o_ref[...] = (acc + b_ref[...]).astype(o_ref.dtype)


def wavlm_ctc_classifier(x_flat, w_t, bias, *, tm=512, compute_dtype=jnp.bfloat16):
    """x_flat: (M, D) float32, w_t: (D, N), bias: (N,).  Returns (M, N) float32.

    The kernel computes on bf16 inputs with f32 accumulation; the feature
    rows are padded to a multiple of the row tile and the label dimension is
    padded to a multiple of 128 (lane-dense output).  Padding is stripped
    before returning.
    """
    M, D = x_flat.shape
    N = w_t.shape[1]
    out_dtype = x_flat.dtype

    # Lane-dense output: pad the label dim up to a multiple of 128.
    N_pad = max(_round_up(N, 128), 128)

    # Effective row tile: multiple of 8, at most the (8-rounded) row count,
    # default 512 (multiple of 128 so the MXU M dimension is filled).
    tm_eff = min(tm, _round_up(M, 8))
    tm_eff = max(_round_up(tm_eff, 8), 8)
    M_pad = _round_up(M, tm_eff)

    # Wrapper-side padding (contiguous XLA pads, essentially free).
    x_p = x_flat if M_pad == M else jnp.pad(x_flat, ((0, M_pad - M), (0, 0)))
    w_p = w_t if N_pad == N else jnp.pad(w_t, ((0, 0), (0, N_pad - N)))
    b_p = bias if N_pad == N else jnp.pad(bias, ((0, N_pad - N),))

    # bf16 for the HBM-bandwidth-bound feature stream and the MXU operands;
    # bias stays f32 (bias add happens in f32 inside the kernel).
    x_p = x_p.astype(compute_dtype)
    w_p = w_p.astype(compute_dtype)
    bias2d = b_p.reshape(1, N_pad).astype(jnp.float32)

    grid = (M_pad // tm_eff,)
    itemsize_in = jnp.dtype(compute_dtype).itemsize
    itemsize_out = jnp.dtype(out_dtype).itemsize
    cost = pl.CostEstimate(
        flops=2 * M_pad * D * N_pad,
        transcendentals=0,
        bytes_accessed=(M_pad * D * itemsize_in
                        + D * N_pad * itemsize_in
                        + N_pad * 4
                        + M_pad * N_pad * itemsize_out),
    )

    out = pl.pallas_call(
        _classifier_kernel,
        out_shape=jax.ShapeDtypeStruct((M_pad, N_pad), out_dtype),
        grid_spec=pltpu.PrefetchScalarGridSpec(
            num_scalar_prefetch=0,
            grid=grid,
            in_specs=[
                pl.BlockSpec((tm_eff, D), lambda i: (i, 0)),   # feature row tile
                pl.BlockSpec((D, N_pad), lambda i: (0, 0)),    # weight (resident)
                pl.BlockSpec((1, N_pad), lambda i: (0, 0)),    # bias   (resident)
            ],
            out_specs=pl.BlockSpec((tm_eff, N_pad), lambda i: (i, 0)),
        ),
        compiler_params=pltpu.CompilerParams(
            dimension_semantics=("parallel",),
        ),
        cost_estimate=cost,
    )(x_p, w_p, bias2d)

    # Strip row / label padding.
    return out[:M, :N]


# ---------------------------------------------------------------------------
# WavLMCTC forward (inference mode: dropout / masking disabled)
# ---------------------------------------------------------------------------
def wavlm_ctc_forward(features, padding_mask, params):
    """features: (B, T, D) pre-extracted WavLM features.
       padding_mask: (B, T) bool.
       Returns (logits (B, T, num_labels), padding_mask)."""
    B, T, D = features.shape
    w_t, bias = params["classifier_w_t"], params["classifier_b"]
    N = w_t.shape[1]

    # final_dropout: nn.Dropout in eval mode == identity (training=False here).
    x_flat = features.reshape(B * T, D)
    logits_flat = wavlm_ctc_classifier(x_flat, w_t, bias)
    logits = logits_flat.reshape(B, T, N)
    return logits, padding_mask


# ---------------------------------------------------------------------------
# Deterministic parameter init (mirrors nn.init in WavLMCTC.__init__)
# ---------------------------------------------------------------------------
def init_params(key, encoder_embed_dim, num_labels):
    # xavier_uniform_ on classifier.weight of shape (num_labels, encoder_embed_dim)
    limit = math.sqrt(6.0 / (num_labels + encoder_embed_dim))
    w = jax.random.uniform(
        key, (num_labels, encoder_embed_dim),
        minval=-limit, maxval=limit, dtype=jnp.float32)
    b = jnp.zeros((num_labels,), dtype=jnp.float32)  # constant_(bias, 0.0)
    return {"classifier_w_t": w.T, "classifier_b": b}


if __name__ == "__main__":
    # Small shapes consistent with the forward pass:
    #   B=2 utterances, T=8 encoder frames, encoder_embed_dim=32, num_labels=32
    B, T, D, NUM_LABELS = 2, 8, 32, 32

    key = jax.random.PRNGKey(0)
    k_feat, k_w = jax.random.split(key)

    # Pre-extracted WavLM features (stand-in for wavlm.extract_features output).
    features = jax.random.normal(k_feat, (B, T, D), dtype=jnp.float32)
    # Padding mask: second utterance has 2 padded frames at the end.
    padding_mask = jnp.zeros((B, T), dtype=bool).at[1, T - 2:].set(True)

    params = init_params(k_w, D, NUM_LABELS)

    logits, out_pad = wavlm_ctc_forward(features, padding_mask, params)
    jax.block_until_ready(logits)

    # Reference checks in plain JAX.
    x_flat = features.reshape(B * T, D)
    w_t, b = params["classifier_w_t"], params["classifier_b"]

    # (a) bf16-input reference (matches the kernel's compute dtype closely).
    ref_bf16 = (x_flat.astype(jnp.bfloat16).astype(jnp.float32)
                @ w_t.astype(jnp.bfloat16).astype(jnp.float32) + b)
    ref_bf16 = ref_bf16.reshape(B, T, NUM_LABELS)
    # (b) full-precision reference (semantic sanity check).
    ref_f32 = (x_flat @ w_t + b).reshape(B, T, NUM_LABELS)

    assert logits.shape == (B, T, NUM_LABELS)
    assert jnp.allclose(logits, ref_bf16, atol=1e-4, rtol=1e-4), \
        "kernel mismatch vs bf16 reference"
    assert jnp.allclose(logits, ref_f32, atol=5e-2, rtol=5e-2), \
        "kernel mismatch vs f32 reference"
    assert bool(jnp.all(out_pad == padding_mask))

    print("KERNEL_OK")
</pallas_src>

<mosaic_0001>
module attributes {stable_mosaic.version = 11 : i64} {
  func.func @_classifier_kernel(%arg0: i32, %arg1: memref<16x32xbf16, #tpu.memory_space<vmem>>, %arg2: memref<32x128xbf16, #tpu.memory_space<vmem>>, %arg3: memref<1x128xf32, #tpu.memory_space<vmem>>, %arg4: memref<16x128xf32, #tpu.memory_space<vmem>>) attributes {dimension_semantics = [#tpu.dimension_semantics<parallel>], iteration_bounds = array<i64: 1>, scalar_prefetch = 0 : i64, scratch_operands = 0 : i64, tpu.core_type = #tpu.core_type<tc>, window_params = [{transform_indices = @transform_0, window_bounds = array<i64: 16, 32>}, {pipeline_mode = #tpu.pipeline_mode<synchronous>, transform_indices = @transform_1, window_bounds = array<i64: 32, 128>}, {pipeline_mode = #tpu.pipeline_mode<synchronous>, transform_indices = @transform_2, window_bounds = array<i64: 1, 128>}, {transform_indices = @transform_3, window_bounds = array<i64: 16, 128>}]} {
    %c0 = arith.constant 0 : index
    %c0_0 = arith.constant 0 : index
    %0 = vector.load %arg1[%c0, %c0_0] : memref<16x32xbf16, #tpu.memory_space<vmem>>, vector<16x32xbf16>
    %c0_1 = arith.constant 0 : index
    %c0_2 = arith.constant 0 : index
    %1 = vector.load %arg2[%c0_1, %c0_2] : memref<32x128xbf16, #tpu.memory_space<vmem>>, vector<32x128xbf16>
    %cst = arith.constant dense<0.000000e+00> : vector<16x128xf32>
    %2 = tpu.matmul %0, %1, %cst {dimension_numbers = #tpu.dot_dimension_numbers<[1], [0], [0], [1], [0, 0, 1, 1], [], []>} : vector<16x32xbf16>, vector<32x128xbf16>, vector<16x128xf32> -> vector<16x128xf32>
    %c0_3 = arith.constant 0 : index
    %c0_4 = arith.constant 0 : index
    %3 = vector.load %arg3[%c0_3, %c0_4] : memref<1x128xf32, #tpu.memory_space<vmem>>, vector<1x128xf32>
    %4 = vector.broadcast %3 : vector<1x128xf32> to vector<16x128xf32>
    %5 = arith.addf %2, %4 : vector<16x128xf32>
    %c0_5 = arith.constant 0 : index
    %c0_6 = arith.constant 0 : index
    %6 = vector.load %arg4[%c0_5, %c0_6] : memref<16x128xf32, #tpu.memory_space<vmem>>, vector<16x128xf32>
    tpu.vector_store %arg4[%c0_5, %c0_6], %5 {strides = array<i32>} : memref<16x128xf32, #tpu.memory_space<vmem>>, vector<16x128xf32>,
    return
  }
  func.func @transform_0(%arg0: i32) -> (i32, i32) {
    %c0_i32 = arith.constant 0 : i32
    %c0_i32_0 = arith.constant 0 : i32
    return %arg0, %c0_i32 : i32, i32
  }
  func.func @transform_1(%arg0: i32) -> (i32, i32) {
    %c0_i32 = arith.constant 0 : i32
    %c0_i32_0 = arith.constant 0 : i32
    %c0_i32_1 = arith.constant 0 : i32
    return %c0_i32, %c0_i32_0 : i32, i32
  }
  func.func @transform_2(%arg0: i32) -> (i32, i32) {
    %c0_i32 = arith.constant 0 : i32
    %c0_i32_0 = arith.constant 0 : i32
    %c0_i32_1 = arith.constant 0 : i32
    return %c0_i32, %c0_i32_0 : i32, i32
  }
  func.func @transform_3(%arg0: i32) -> (i32, i32) {
    %c0_i32 = arith.constant 0 : i32
    %c0_i32_0 = arith.constant 0 : i32
    return %arg0, %c0_i32 : i32, i32
  }
}

</mosaic_0001>

<llo_original>
// kernel: tpu_custom_call.1
$region0: #{tpu_custom_call.1}
  #allocation0 [shape = 'u32[]', space=smem, size = 0x4, offset = 0x4, fixed_abs, tag = 'smem constant byte address 0x4 - core index']
  #allocation1 [shape = 'u32[144,128]{1,0:T(1,128)}', space=vmem, size = 0x12000, scoped, tag = 'internal scratch']
  %s0 = inlined_call_operand.hbm [shape: bf16[16,32], index: 0, kind: input, shape index: {}]
  %s1 = inlined_call_operand.hbm [shape: bf16[32,128], index: 1, kind: input, shape index: {}]
  %s2 = inlined_call_operand.vmem [shape: f32[1,128], index: 2, kind: input, shape index: {}]
  %s3 = inlined_call_operand.hbm [shape: f32[16,128], index: 3, kind: output, shape index: {}]
  %s4 = sld [smem:[#allocation0]]
  $region30: #{tpu_custom_call.1} parent=0
    _
  %s6 = ssub.s32 1, %s4
  %s7 = scalar_select 0, %s6, %s4
  $region1: #{tpu_custom_call.1} parent=0
    #allocation2 [shape = 'u8[4096]{0}', space=vmem, size = 0x1000, scoped, tag = 'input window, operand 0, single buffered']
    #allocation3 [shape = 's32[1]{0}', space=sflag, size = 0x4, scoped, tag = 'scoped memory for tpu_custom_call.1']
    #allocation4 [shape = 's32[1]{0}', space=sflag, size = 0x4, scoped, tag = 'scoped memory for tpu_custom_call.1']
    #allocation5 [shape = 'u8[8192]{0}', space=vmem, size = 0x2000, scoped, tag = 'input window, operand 1, single buffered']
    #allocation6 [shape = 's32[1]{0}', space=sflag, size = 0x4, scoped, tag = 'scoped memory for tpu_custom_call.1']
    #allocation7 [shape = 'u8[8192]{0}', space=vmem, size = 0x2000, scoped, tag = 'output window, operand 0, single buffered']
    %8 = vsyncpa [#allocation3], 0
    %9 = vsyncpa [#allocation6], 0
    %10 = vsyncpa [#allocation4], 0
    // Predicated region
    $region2: #{tpu_custom_call.1} parent=1 // pred_check
      _
    $region3: #{tpu_custom_call.1} parent=1 // pred_check_branch
      %12 = sbr.rel (0) target = $region5
    $region4: #{tpu_custom_call.1} parent=1 // pred_region
      %s14 = ssub.s32 128, 128
      %15 = vsyncadd [#allocation3], %s14
      %s16 = sshll.u32 [#allocation2], 4
      %s17 = int_to_ptr.vmem [resolvable:$true] %s16
      %22 = dma.hbm_to_vmem [thread:$0]  %s0, 128, %s17, [#allocation3], 64, 64, 4
    $region5: #{tpu_custom_call.1} parent=1 // pred_fallthru
      _
    // Predicated region
    $region6: #{tpu_custom_call.1} parent=1 // pred_check
      _
    $region7: #{tpu_custom_call.1} parent=1 // pred_check_branch
      %24 = sbr.rel (0) target = $region9
    $region8: #{tpu_custom_call.1} parent=1 // pred_region
      %s26 = ssub.s32 256, 256
      %27 = vsyncadd [#allocation6], %s26
      %s28 = sshll.u32 [#allocation5], 4
      %s29 = int_to_ptr.vmem [resolvable:$true] %s28
      %34 = dma.hbm_to_vmem [thread:$0]  %s1, 256, %s29, [#allocation6], 64, 64, 4
    $region9: #{tpu_custom_call.1} parent=1 // pred_fallthru
      _
    // Predicated region
    $region10: #{tpu_custom_call.1} parent=1 // pred_check
      _
    $region11: #{tpu_custom_call.1} parent=1 // pred_check_branch
      %36 = sbr.rel (0) target = $region13
    $region12: #{tpu_custom_call.1} parent=1 // pred_region
      _
    $region13: #{tpu_custom_call.1} parent=1 // pred_fallthru
      _
    // Predicated region
    $region14: #{tpu_custom_call.1} parent=1 // pred_check
      _
    $region15: #{tpu_custom_call.1} parent=1 // pred_check_branch
      %38 = sbr.rel (0) target = $region17
    $region16: #{tpu_custom_call.1} parent=1 // pred_region
      %39 = dma.done [#allocation3], 128
    $region17: #{tpu_custom_call.1} parent=1 // pred_fallthru
      _
    // Predicated region
    $region18: #{tpu_custom_call.1} parent=1 // pred_check
      _
    $region19: #{tpu_custom_call.1} parent=1 // pred_check_branch
      %41 = sbr.rel (0) target = $region21
    $region20: #{tpu_custom_call.1} parent=1 // pred_region
      %42 = dma.done [#allocation6], 256
    $region21: #{tpu_custom_call.1} parent=1 // pred_fallthru
      _
    %v44 = vld [vmem:[#allocation2] sm:$0xf]
    %v45 = vld [vmem:[#allocation2 + $0x4] sm:$0xf]
    %v46 = vld [vmem:[#allocation5] sm:$0xf]
    %v47 = vld [vmem:[#allocation5 + $0x4] sm:$0xf]
    %v48 = vld [vmem:[#allocation5 + $0x8] sm:$0xf]
    %v49 = vld [vmem:[#allocation5 + $0xc] sm:$0xf]
    %v50 = vld [vmem:[%s2] sm:$0x1]
    %v52 = vlaneseq
    %v53 = vshrl.u32 %v52, 7
    %v54 = vsub.s32 0, %v53
    %v55 = vrot.slane %v50, %v54
    %v59 = vunpack.c.l.b16 %v44
    %v60 = vunpack.c.l.b16 %v45
    %v61 = vpack.c.b16 %v60, %v59
    %v66 = vunpack.c.l.b16 %v46
    %v67 = vunpack.c.l.b16 %v47
    %v68 = vunpack.c.l.b16 %v48
    %v69 = vunpack.c.l.b16 %v49
    %v70 = vpack.c.b16 %v67, %v66
    %v71 = vpack.c.b16 %v69, %v68
    %vm74 = vcmask 261120
    %v76 = vsel %vm74, %v61, 0
    %78 = vmatprep.subr.bf16.mxu0 0
    %79 = vmatpush1.bf16.msra.mxu0 0
    %80 = vmatprep.subr.bf16.mxu0 0
    %81 = vmatpush1.bf16.msra.mxu0 0
    %82 = vmatprep.subr.bf16.mxu0 0
    %83 = vmatpush1.bf16.msra.mxu0 0
    %84 = vmatprep.subr.bf16.mxu0 0
    %85 = vmatpush1.bf16.msra.mxu0 0
    %86 = vmatprep.subr.bf16.mxu0 0
    %87 = vmatpush1.bf16.msra.mxu0 0
    %88 = vmatprep.subr.bf16.mxu0 0
    %89 = vmatpush1.bf16.msra.mxu0 0
    %90 = vmatprep.subr.bf16.mxu0 0
    %91 = vmatpush1.bf16.msra.mxu0 %v71
    %92 = vmatprep.subr.bf16.mxu0 0
    %93 = vmatpush1.bf16.msra.mxu0 %v70
    %94 = vmatprep.subr.bf16.mxu0 0
    %95 = vmatpush2.bf16.msra.mxu0 0
    %96 = vmatprep.subr.bf16.mxu0 0
    %97 = vmatpush2.bf16.msra.mxu0 0
    %98 = vmatprep.subr.bf16.mxu0 0
    %99 = vmatpush2.bf16.msra.mxu0 0
    %100 = vmatprep.subr.bf16.mxu0 0
    %101 = vmatpush2.bf16.msra.mxu0 0
    %102 = vmatprep.subr.bf16.mxu0 0
    %103 = vmatpush2.bf16.msra.mxu0 0
    %104 = vmatprep.subr.bf16.mxu0 0
    %105 = vmatpush2.bf16.msra.mxu0 0
    %106 = vmatprep.subr.bf16.mxu0 0
    %107 = vmatpush2.bf16.msra.mxu0 0
    %108 = vmatprep.subr.bf16.mxu0 0
    %109 = vmatpush2.bf16.msra.mxu0 0
    %110 = vmatprep.mubr.bf16.mxu0 0
    %111 = vmatmul.mubr.bf16.gmra.mxu0 %v76
    %v112 = vpop.f32.mrf.mxu0
    %v113 = vadd.f32 %v55, %v112
    %v114 = vpop.f32.mrf.mxu0
    %v115 = vpop.f32.mrf.mxu0
    %v116 = vadd.f32 %v55, %v115
    %v117 = vpop.f32.mrf.mxu0
    %118 = vdwg.mxu0
    %119 = vst [vmem:[#allocation7] sm:$0xff] %v113
    %120 = vst [vmem:[#allocation7 + $0x8] sm:$0xff] %v116
    // Predicated region
    $region22: #{tpu_custom_call.1} parent=1 // pred_check
      _
    $region23: #{tpu_custom_call.1} parent=1 // pred_check_branch
      %122 = sbr.rel (0) target = $region25
    $region24: #{tpu_custom_call.1} parent=1 // pred_region
      %s124 = ssub.s32 256, 256
      %125 = vsyncadd [#allocation4], %s124
      %s126 = sshll.u32 [#allocation7], 4
      %s127 = int_to_ptr.vmem [resolvable:$true] %s126
      %132 = dma.vmem_to_hbm [thread:$0]  %s127, 256, %s3, [#allocation4], 128, 128, 8
    $region25: #{tpu_custom_call.1} parent=1 // pred_fallthru
      _
    // Predicated region
    $region26: #{tpu_custom_call.1} parent=1 // pred_check
      _
    $region27: #{tpu_custom_call.1} parent=1 // pred_check_branch
      %134 = sbr.rel (0) target = $region29
    $region28: #{tpu_custom_call.1} parent=1 // pred_region
      %135 = dma.done [#allocation4], 256
    $region29: #{tpu_custom_call.1} parent=1 // pred_fallthru
      _
    %136 = vsyncpa [#allocation3], 1
    %137 = vsyncpa [#allocation6], 1
    %138 = vsyncpa [#allocation4], 1

</llo_original>
